<compile_context>
chip_gen: v7x
topology: tpu7x:2x2x1
jax: 0.10.0
libtpu: 0.0.40
codegen_flags: <defaults>
</compile_context>

<pallas_src>
import jax
import jax.numpy as jnp
from jax.experimental import pallas as pl
from jax.experimental.pallas import tpu as pltpu


def _conv_matmul_kernel(w_ref, p_ref, o_ref):
    # w_ref: (OC_pad, K_pad)   p_ref: (K_pad, L_pad)   o_ref: (OC_pad, L_pad)
    o_ref[...] = jnp.dot(
        w_ref[...], p_ref[...], preferred_element_type=jnp.float32
    ).astype(o_ref.dtype)


def _round_up(v, m):
    return (v + m - 1) // m * m


def annotated_conv_forward(x, w):
    """Forward of AnnotatedConvModel: quant (id) -> Conv2d(3,3,3,bias=False) -> dequant (id)."""
    N, C, H, W = x.shape
    OC, IC, KH, KW = w.shape
    assert IC == C
    OH = H - KH + 1
    OW = W - KW + 1

    K = C * KH * KW          # contraction size (27)
    L = N * OH * OW          # lane-dense output length (392)

    # ---- im2col in the wrapper (static XLA slices): patches[(c,kh,kw), (n,oh,ow)] ----
    cols = []
    for kh in range(KH):
        for kw in range(KW):
            cols.append(x[:, :, kh:kh + OH, kw:kw + OW])   # (N, C, OH, OW)
    p = jnp.stack(cols, axis=0)                  # (KH*KW, N, C, OH, OW)
    p = p.transpose(2, 0, 1, 3, 4)               # (C, KH*KW, N, OH, OW)
    p = p.reshape(K, L)                          # (27, 392), K-order = (c, kh, kw)

    w_mat = w.reshape(OC, K)                     # (3, 27), same (c, kh, kw) order

    # ---- zero-pad to (8,128)-aligned tiles: full-lane, unmasked loads/stores ----
    K_pad = _round_up(K, 32)        # 32  (sublane axis of patches)
    L_pad = _round_up(L, 128)       # 512 (lane axis)
    OC_pad = _round_up(OC, 8)       # 8   (sublane axis of output)

    p_pad = jnp.pad(p, ((0, K_pad - K), (0, L_pad - L)))
    w_pad = jnp.pad(w_mat, ((0, OC_pad - OC), (0, K_pad - K)))

    out_pad = pl.pallas_call(
        _conv_matmul_kernel,
        out_shape=jax.ShapeDtypeStruct((OC_pad, L_pad), x.dtype),
        grid_spec=pltpu.PrefetchScalarGridSpec(
            num_scalar_prefetch=0,
            grid=(1,),                                   # single step: whole problem in VMEM
            in_specs=[
                pl.BlockSpec((OC_pad, K_pad), lambda i: (0, 0)),
                pl.BlockSpec((K_pad, L_pad), lambda i: (0, 0)),
            ],
            out_specs=pl.BlockSpec((OC_pad, L_pad), lambda i: (0, 0)),
        ),
        compiler_params=pltpu.CompilerParams(
            dimension_semantics=("arbitrary",)),
    )(w_pad, p_pad)

    # ---- un-pad and restore NCHW ----
    out = out_pad[:OC, :L].reshape(OC, N, OH, OW).transpose(1, 0, 2, 3)
    return out


if __name__ == "__main__":
    key = jax.random.PRNGKey(0)
    kx, kw = jax.random.split(key)

    # Conv2d(3, 3, 3, bias=False): weight shape (3, 3, 3, 3).
    # Deterministic init (scaled uniform, analogous to PyTorch's default init).
    N, C, H, W = 2, 3, 16, 16
    OC, KH, KW = 3, 3, 3
    fan_in = C * KH * KW
    bound = 1.0 / jnp.sqrt(jnp.float32(fan_in))
    w = jax.random.uniform(kw, (OC, C, KH, KW), jnp.float32, -bound, bound)
    x = jax.random.normal(kx, (N, C, H, W), dtype=jnp.float32)

    out = jax.block_until_ready(annotated_conv_forward(x, w))

    # Reference check against XLA's conv (NCHW / OIHW, VALID, stride 1).
    ref = jax.lax.conv_general_dilated(
        x, w, window_strides=(1, 1), padding="VALID",
        dimension_numbers=("NCHW", "OIHW", "NCHW"))
    assert out.shape == (N, OC, H - KH + 1, W - KW + 1)
    assert jnp.allclose(out, ref, atol=1e-4, rtol=1e-4)

    print("KERNEL_OK")
</pallas_src>

<mosaic_0001>
module attributes {stable_mosaic.version = 11 : i64} {
  func.func @_conv_matmul_kernel(%arg0: i32, %arg1: memref<8x32xf32, #tpu.memory_space<vmem>>, %arg2: memref<32x512xf32, #tpu.memory_space<vmem>>, %arg3: memref<8x512xf32, #tpu.memory_space<vmem>>) attributes {dimension_semantics = [#tpu.dimension_semantics<arbitrary>], iteration_bounds = array<i64: 1>, scalar_prefetch = 0 : i64, scratch_operands = 0 : i64, tpu.core_type = #tpu.core_type<tc>, window_params = [{pipeline_mode = #tpu.pipeline_mode<synchronous>, transform_indices = @transform_0, window_bounds = array<i64: 8, 32>}, {pipeline_mode = #tpu.pipeline_mode<synchronous>, transform_indices = @transform_1, window_bounds = array<i64: 32, 512>}, {pipeline_mode = #tpu.pipeline_mode<synchronous>, transform_indices = @transform_2, window_bounds = array<i64: 8, 512>}]} {
    %c0 = arith.constant 0 : index
    %c0_0 = arith.constant 0 : index
    %0 = vector.load %arg1[%c0, %c0_0] : memref<8x32xf32, #tpu.memory_space<vmem>>, vector<8x32xf32>
    %c0_1 = arith.constant 0 : index
    %c0_2 = arith.constant 0 : index
    %1 = vector.load %arg2[%c0_1, %c0_2] : memref<32x512xf32, #tpu.memory_space<vmem>>, vector<32x512xf32>
    %cst = arith.constant dense<0.000000e+00> : vector<8x512xf32>
    %2 = tpu.matmul %0, %1, %cst {dimension_numbers = #tpu.dot_dimension_numbers<[1], [0], [0], [1], [0, 0, 1, 1], [], []>} : vector<8x32xf32>, vector<32x512xf32>, vector<8x512xf32> -> vector<8x512xf32>
    %c0_3 = arith.constant 0 : index
    %c0_4 = arith.constant 0 : index
    %3 = vector.load %arg3[%c0_3, %c0_4] : memref<8x512xf32, #tpu.memory_space<vmem>>, vector<8x512xf32>
    tpu.vector_store %arg3[%c0_3, %c0_4], %2 {strides = array<i32>} : memref<8x512xf32, #tpu.memory_space<vmem>>, vector<8x512xf32>,
    return
  }
  func.func @transform_0(%arg0: i32) -> (i32, i32) {
    %c0_i32 = arith.constant 0 : i32
    %c0_i32_0 = arith.constant 0 : i32
    %c0_i32_1 = arith.constant 0 : i32
    return %c0_i32, %c0_i32_0 : i32, i32
  }
  func.func @transform_1(%arg0: i32) -> (i32, i32) {
    %c0_i32 = arith.constant 0 : i32
    %c0_i32_0 = arith.constant 0 : i32
    %c0_i32_1 = arith.constant 0 : i32
    return %c0_i32, %c0_i32_0 : i32, i32
  }
  func.func @transform_2(%arg0: i32) -> (i32, i32) {
    %c0_i32 = arith.constant 0 : i32
    %c0_i32_0 = arith.constant 0 : i32
    %c0_i32_1 = arith.constant 0 : i32
    return %c0_i32, %c0_i32_0 : i32, i32
  }
}

</mosaic_0001>

<llo_original>
// kernel: tpu_custom_call.1
$region0: #{tpu_custom_call.1}
  #allocation0 [shape = 'u32[]', space=smem, size = 0x4, offset = 0x4, fixed_abs, tag = 'smem constant byte address 0x4 - core index']
  #allocation1 [shape = 'u32[144,128]{1,0:T(1,128)}', space=vmem, size = 0x12000, scoped, tag = 'internal scratch']
  %s0 = inlined_call_operand.hbm [shape: f32[8,32], index: 0, kind: input, shape index: {}]
  %s1 = inlined_call_operand.hbm [shape: f32[32,512], index: 1, kind: input, shape index: {}]
  %s2 = inlined_call_operand.hbm [shape: f32[8,512], index: 2, kind: output, shape index: {}]
  %s3 = sld [smem:[#allocation0]]
  $region26: #{tpu_custom_call.1} parent=0
    _
  %s5 = ssub.s32 1, %s3
  %s6 = scalar_select 0, %s5, %s3
  $region1: #{tpu_custom_call.1} parent=0
    #allocation2 [shape = 'u8[4096]{0}', space=vmem, size = 0x1000, scoped, tag = 'input window, operand 0, single buffered']
    #allocation3 [shape = 's32[1]{0}', space=sflag, size = 0x4, scoped, tag = 'scoped memory for tpu_custom_call.1']
    #allocation4 [shape = 's32[1]{0}', space=sflag, size = 0x4, scoped, tag = 'scoped memory for tpu_custom_call.1']
    #allocation5 [shape = 'u8[65536]{0}', space=vmem, size = 0x10000, scoped, tag = 'input window, operand 1, single buffered']
    #allocation6 [shape = 's32[1]{0}', space=sflag, size = 0x4, scoped, tag = 'scoped memory for tpu_custom_call.1']
    #allocation7 [shape = 'u8[16384]{0}', space=vmem, size = 0x4000, scoped, tag = 'output window, operand 0, single buffered']
    %7 = vsyncpa [#allocation3], 0
    %8 = vsyncpa [#allocation6], 0
    %9 = vsyncpa [#allocation4], 0
    // Predicated region
    $region2: #{tpu_custom_call.1} parent=1 // pred_check
      _
    $region3: #{tpu_custom_call.1} parent=1 // pred_check_branch
      %11 = sbr.rel (0) target = $region5
    $region4: #{tpu_custom_call.1} parent=1 // pred_region
      %s13 = ssub.s32 128, 128
      %14 = vsyncadd [#allocation3], %s13
      %s16 = sshll.u32 [#allocation2], 4
      %s17 = int_to_ptr.vmem [resolvable:$true] %s16
      %19 = dma.hbm_to_vmem [thread:$0]  %s0, 128, %s17, [#allocation3]
    $region5: #{tpu_custom_call.1} parent=1 // pred_fallthru
      _
    // Predicated region
    $region6: #{tpu_custom_call.1} parent=1 // pred_check
      _
    $region7: #{tpu_custom_call.1} parent=1 // pred_check_branch
      %21 = sbr.rel (0) target = $region9
    $region8: #{tpu_custom_call.1} parent=1 // pred_region
      %s23 = ssub.s32 2048, 2048
      %24 = vsyncadd [#allocation6], %s23
      %s25 = sshll.u32 [#allocation5], 4
      %s26 = int_to_ptr.vmem [resolvable:$true] %s25
      %31 = dma.hbm_to_vmem [thread:$0]  %s1, 2048, %s26, [#allocation6], 512, 512, 32
    $region9: #{tpu_custom_call.1} parent=1 // pred_fallthru
      _
    // Predicated region
    $region10: #{tpu_custom_call.1} parent=1 // pred_check
      _
    $region11: #{tpu_custom_call.1} parent=1 // pred_check_branch
      %33 = sbr.rel (0) target = $region13
    $region12: #{tpu_custom_call.1} parent=1 // pred_region
      %34 = dma.done [#allocation3], 128
    $region13: #{tpu_custom_call.1} parent=1 // pred_fallthru
      _
    // Predicated region
    $region14: #{tpu_custom_call.1} parent=1 // pred_check
      _
    $region15: #{tpu_custom_call.1} parent=1 // pred_check_branch
      %36 = sbr.rel (0) target = $region17
    $region16: #{tpu_custom_call.1} parent=1 // pred_region
      %37 = dma.done [#allocation6], 2048
    $region17: #{tpu_custom_call.1} parent=1 // pred_fallthru
      _
    %v38 = vld [vmem:[#allocation2] sm:$0xff]
    %v39 = vld [vmem:[#allocation5] sm:$0xff]
    %v40 = vld [vmem:[#allocation5 + $0x8] sm:$0xff]
    %v41 = vld [vmem:[#allocation5 + $0x10] sm:$0xff]
    %v42 = vld [vmem:[#allocation5 + $0x18] sm:$0xff]
    %v43 = vld [vmem:[#allocation5 + $0x20] sm:$0xff]
    %v44 = vld [vmem:[#allocation5 + $0x28] sm:$0xff]
    %v45 = vld [vmem:[#allocation5 + $0x30] sm:$0xff]
    %v46 = vld [vmem:[#allocation5 + $0x38] sm:$0xff]
    %v47 = vld [vmem:[#allocation5 + $0x40] sm:$0xff]
    %v48 = vld [vmem:[#allocation5 + $0x48] sm:$0xff]
    %v49 = vld [vmem:[#allocation5 + $0x50] sm:$0xff]
    %v50 = vld [vmem:[#allocation5 + $0x58] sm:$0xff]
    %v51 = vld [vmem:[#allocation5 + $0x60] sm:$0xff]
    %v52 = vld [vmem:[#allocation5 + $0x68] sm:$0xff]
    %v53 = vld [vmem:[#allocation5 + $0x70] sm:$0xff]
    %v54 = vld [vmem:[#allocation5 + $0x78] sm:$0xff]
    %vm55 = vcmask 261120
    %v57 = vsel %vm55, %v38, 0
    %59 = vmatprep.subr.mxu0 %v40
    %60 = vmatpush1.msra.mxu0 %v39
    %61 = vmatprep.subr.mxu0 %v44
    %62 = vmatpush1.msra.mxu0 %v43
    %63 = vmatprep.subr.mxu0 %v48
    %64 = vmatpush1.msra.mxu0 %v47
    %65 = vmatprep.subr.mxu0 %v52
    %66 = vmatpush1.msra.mxu0 %v51
    %67 = vmatprep.subr.mxu0 0.0
    %68 = vmatpush1.msra.mxu0 0.0
    %69 = vmatprep.subr.mxu0 0.0
    %70 = vmatpush1.msra.mxu0 0.0
    %71 = vmatprep.subr.mxu0 0.0
    %72 = vmatpush1.msra.mxu0 0.0
    %73 = vmatprep.subr.mxu0 0.0
    %74 = vmatpush1.msra.mxu0 0.0
    %75 = vmatprep.subr.mxu0 0.0
    %76 = vmatpush1.msra.mxu0 0.0
    %77 = vmatprep.subr.mxu0 0.0
    %78 = vmatpush1.msra.mxu0 0.0
    %79 = vmatprep.subr.mxu0 0.0
    %80 = vmatpush1.msra.mxu0 0.0
    %81 = vmatprep.subr.mxu0 0.0
    %82 = vmatpush1.msra.mxu0 0.0
    %83 = vmatprep.subr.mxu0 0.0
    %84 = vmatpush1.msra.mxu0 0.0
    %85 = vmatprep.subr.mxu0 0.0
    %86 = vmatpush1.msra.mxu0 0.0
    %87 = vmatprep.subr.mxu0 0.0
    %88 = vmatpush1.msra.mxu0 0.0
    %89 = vmatprep.subr.mxu0 0.0
    %90 = vmatpush1.msra.mxu0 0.0
    %91 = vmatprep.subr.mxu0 0.0
    %92 = vmatpush1.msra.mxu0 0.0
    %93 = vmatprep.subr.mxu0 0.0
    %94 = vmatpush1.msra.mxu0 0.0
    %95 = vmatprep.subr.mxu0 0.0
    %96 = vmatpush1.msra.mxu0 0.0
    %97 = vmatprep.subr.mxu0 0.0
    %98 = vmatpush1.msra.mxu0 0.0
    %99 = vmatprep.subr.mxu0 0.0
    %100 = vmatpush1.msra.mxu0 0.0
    %101 = vmatprep.subr.mxu0 0.0
    %102 = vmatpush1.msra.mxu0 0.0
    %103 = vmatprep.subr.mxu0 0.0
    %104 = vmatpush1.msra.mxu0 0.0
    %105 = vmatprep.subr.mxu0 0.0
    %106 = vmatpush1.msra.mxu0 0.0
    %107 = vmatprep.subr.mxu0 0.0
    %108 = vmatpush1.msra.mxu0 0.0
    %109 = vmatprep.subr.mxu0 0.0
    %110 = vmatpush1.msra.mxu0 0.0
    %111 = vmatprep.subr.mxu0 0.0
    %112 = vmatpush1.msra.mxu0 0.0
    %113 = vmatprep.subr.mxu0 0.0
    %114 = vmatpush1.msra.mxu0 0.0
    %115 = vmatprep.subr.mxu0 0.0
    %116 = vmatpush1.msra.mxu0 0.0
    %117 = vmatprep.subr.mxu0 0.0
    %118 = vmatpush1.msra.mxu0 0.0
    %119 = vmatprep.subr.mxu0 0.0
    %120 = vmatpush1.msra.mxu0 0.0
    %121 = vmatprep.subr.mxu0 0.0
    %122 = vmatpush1.msra.mxu0 0.0
    %123 = vmatprep.mubr.f32.mxu0 0.0
    %124 = vmatmul.mubr.f32.gmra.mrb[0].mxu0 %v57
    %v125 = vpop.f32.mrb[0].mxu0
    %v126 = vadd.f32 0.0, %v125
    %v127 = vpop.f32.mrb[0].mxu0
    %v128 = vadd.f32 0.0, %v127
    %129 = vdwg.mxu0
    %130 = vmatprep.subr.mxu0 %v42
    %131 = vmatpush1.msra.mxu0 %v41
    %132 = vmatprep.subr.mxu0 %v46
    %133 = vmatpush1.msra.mxu0 %v45
    %134 = vmatprep.subr.mxu0 %v50
    %135 = vmatpush1.msra.mxu0 %v49
    %136 = vmatprep.subr.mxu0 %v54
    %137 = vmatpush1.msra.mxu0 %v53
    %138 = vmatprep.subr.mxu0 0.0
    %139 = vmatpush1.msra.mxu0 0.0
    %140 = vmatprep.subr.mxu0 0.0
    %141 = vmatpush1.msra.mxu0 0.0
    %142 = vmatprep.subr.mxu0 0.0
    %143 = vmatpush1.msra.mxu0 0.0
    %144 = vmatprep.subr.mxu0 0.0
    %145 = vmatpush1.msra.mxu0 0.0
    %146 = vmatprep.subr.mxu0 0.0
    %147 = vmatpush1.msra.mxu0 0.0
    %148 = vmatprep.subr.mxu0 0.0
    %149 = vmatpush1.msra.mxu0 0.0
    %150 = vmatprep.subr.mxu0 0.0
    %151 = vmatpush1.msra.mxu0 0.0
    %152 = vmatprep.subr.mxu0 0.0
    %153 = vmatpush1.msra.mxu0 0.0
    %154 = vmatprep.subr.mxu0 0.0
    %155 = vmatpush1.msra.mxu0 0.0
    %156 = vmatprep.subr.mxu0 0.0
    %157 = vmatpush1.msra.mxu0 0.0
    %158 = vmatprep.subr.mxu0 0.0
    %159 = vmatpush1.msra.mxu0 0.0
    %160 = vmatprep.subr.mxu0 0.0
    %161 = vmatpush1.msra.mxu0 0.0
    %162 = vmatprep.subr.mxu0 0.0
    %163 = vmatpush1.msra.mxu0 0.0
    %164 = vmatprep.subr.mxu0 0.0
    %165 = vmatpush1.msra.mxu0 0.0
    %166 = vmatprep.subr.mxu0 0.0
    %167 = vmatpush1.msra.mxu0 0.0
    %168 = vmatprep.subr.mxu0 0.0
    %169 = vmatpush1.msra.mxu0 0.0
    %170 = vmatprep.subr.mxu0 0.0
    %171 = vmatpush1.msra.mxu0 0.0
    %172 = vmatprep.subr.mxu0 0.0
    %173 = vmatpush1.msra.mxu0 0.0
    %174 = vmatprep.subr.mxu0 0.0
    %175 = vmatpush1.msra.mxu0 0.0
    %176 = vmatprep.subr.mxu0 0.0
    %177 = vmatpush1.msra.mxu0 0.0
    %178 = vmatprep.subr.mxu0 0.0
    %179 = vmatpush1.msra.mxu0 0.0
    %180 = vmatprep.subr.mxu0 0.0
    %181 = vmatpush1.msra.mxu0 0.0
    %182 = vmatprep.subr.mxu0 0.0
    %183 = vmatpush1.msra.mxu0 0.0
    %184 = vmatprep.subr.mxu0 0.0
    %185 = vmatpush1.msra.mxu0 0.0
    %186 = vmatprep.subr.mxu0 0.0
    %187 = vmatpush1.msra.mxu0 0.0
    %188 = vmatprep.subr.mxu0 0.0
    %189 = vmatpush1.msra.mxu0 0.0
    %190 = vmatprep.subr.mxu0 0.0
    %191 = vmatpush1.msra.mxu0 0.0
    %192 = vmatprep.subr.mxu0 0.0
    %193 = vmatpush1.msra.mxu0 0.0
    %194 = vmatprep.mubr.f32.mxu0 0.0
    %195 = vmatmul.mubr.f32.gmra.mrb[0].mxu0 %v57
    %v196 = vpop.f32.mrb[0].mxu0
    %v197 = vadd.f32 0.0, %v196
    %v198 = vpop.f32.mrb[0].mxu0
    %v199 = vadd.f32 0.0, %v198
    %200 = vdwg.mxu0
    %201 = vst [vmem:[#allocation7] sm:$0xff] %v126
    %202 = vst [vmem:[#allocation7 + $0x8] sm:$0xff] %v128
    %203 = vst [vmem:[#allocation7 + $0x10] sm:$0xff] %v197
    %204 = vst [vmem:[#allocation7 + $0x18] sm:$0xff] %v199
    // Predicated region
    $region18: #{tpu_custom_call.1} parent=1 // pred_check
      _
    $region19: #{tpu_custom_call.1} parent=1 // pred_check_branch
      %206 = sbr.rel (0) target = $region21
    $region20: #{tpu_custom_call.1} parent=1 // pred_region
      %s208 = ssub.s32 512, 512
      %209 = vsyncadd [#allocation4], %s208
      %s211 = sshll.u32 [#allocation7], 4
      %s212 = int_to_ptr.vmem [resolvable:$true] %s211
      %214 = dma.vmem_to_hbm [thread:$0]  %s212, 512, %s2, [#allocation4]
    $region21: #{tpu_custom_call.1} parent=1 // pred_fallthru
      _
    // Predicated region
    $region22: #{tpu_custom_call.1} parent=1 // pred_check
      _
    $region23: #{tpu_custom_call.1} parent=1 // pred_check_branch
      %216 = sbr.rel (0) target = $region25
    $region24: #{tpu_custom_call.1} parent=1 // pred_region
      %217 = dma.done [#allocation4], 512
    $region25: #{tpu_custom_call.1} parent=1 // pred_fallthru
      _
    %218 = vsyncpa [#allocation3], 1
    %219 = vsyncpa [#allocation6], 1
    %220 = vsyncpa [#allocation4], 1

</llo_original>
